<compile_context>
chip_gen: v7x
topology: tpu7x:2x2x1
jax: 0.10.0
libtpu: 0.0.40
codegen_flags: <defaults>
</compile_context>

<pallas_src>
import functools

import jax
import jax.numpy as jnp
from jax.experimental import pallas as pl
from jax.experimental.pallas import tpu as pltpu

HIDDEN = 20                      # true hidden width of the torch module
H_PAD = 128                      # lane-padded hidden width
BN_EPS = 1e-5
TM_MAX = 512                     # max A row tile (output rows per grid step)
TK_MAX = 1024                    # max A source-node (reduction) tile
VMEM_LIMIT = 48 * 1024 * 1024    # raised scoped-VMEM budget for the streaming passes


def _round_up(x, m):
    return (x + m - 1) // m * m


def _pick_tile(n_pad, cap):
    # Largest tile <= cap that divides n_pad (n_pad and cap are multiples of 128,
    # or cap = n_pad//2 which is a multiple of 64; either way the loop terminates
    # on a divisor that satisfies the sublane/lane layout constraints).
    t = min(cap, n_pad)
    while n_pad % t:
        t -= 128
    return t


def _tiles(n_pad):
    tk = _pick_tile(n_pad, TK_MAX)
    tm = _pick_tile(n_pad, TM_MAX)
    # v7x megacore: keep at least 2 row tiles so the "parallel" row axis can be
    # split across the two TensorCores (v5e/v6e are single-TC; harmless there).
    if n_pad // tm < 2 and n_pad >= 256:
        tm = _pick_tile(n_pad, n_pad // 2)
    return tm, tk


# ----------------------------------------------------------------------------- kernels


def _xw_kernel(x_ref, w_ref, o_ref):
    # Tiny per-row-tile matmul: xw1 = x @ W1, emitted in bf16 for the A-streaming pass.
    o_ref[...] = jnp.dot(x_ref[...], w_ref[...],
                         preferred_element_type=jnp.float32).astype(jnp.bfloat16)


def _spmm_relu_stats_kernel(n_ref, a_ref, xw_ref, b_ref,
                            h_ref, sum_ref, ssq_ref, acc_ref, *, tm, tk):
    # One (row-tile i, K-tile k) step of h = relu(A @ xw + b), accumulated over k.
    # xw is VMEM-resident (constant block); the current K window is sliced with pl.ds.
    # The finalize step also emits masked per-row-tile BN partial statistics.
    i = pl.program_id(0)
    k = pl.program_id(1)

    @pl.when(k == 0)
    def _():
        acc_ref[...] = jnp.zeros_like(acc_ref)

    off = pl.multiple_of(k * tk, tk)
    acc_ref[...] += jnp.dot(a_ref[...], xw_ref[pl.ds(off, tk), :],
                            preferred_element_type=jnp.float32)

    @pl.when(k == pl.num_programs(1) - 1)
    def _():
        h = jnp.maximum(acc_ref[...] + b_ref[...], 0.0)
        h_ref[...] = h
        # Mask padded rows (they hold relu(bias)) so BN stats only see real nodes.
        rows = jax.lax.broadcasted_iota(jnp.int32, h.shape, 0) + i * tm
        hm = jnp.where(rows < n_ref[0], h, 0.0)
        sum_ref[0] = jnp.sum(hm, axis=0, keepdims=True)
        ssq_ref[0] = jnp.sum(hm * hm, axis=0, keepdims=True)


def _bn_xw_kernel(n_ref, h_ref, sum_ref, ssq_ref, g_ref, be_ref, w_ref,
                  hn_ref, xw_ref):
    # Row-tiled BatchNorm (batch stats from the tiny partial-sum arrays, biased
    # variance over the real nodes only) + the small hn @ W_next matmul (bf16 out).
    inv_n = 1.0 / n_ref[0].astype(jnp.float32)
    mu = jnp.sum(sum_ref[...], axis=0) * inv_n            # (1, H_PAD)
    ex2 = jnp.sum(ssq_ref[...], axis=0) * inv_n
    var = jnp.maximum(ex2 - mu * mu, 0.0)
    hn = (h_ref[...] - mu) * jax.lax.rsqrt(var + BN_EPS) * g_ref[...] + be_ref[...]
    hn_ref[...] = hn
    xw_ref[...] = jnp.dot(hn, w_ref[...],
                          preferred_element_type=jnp.float32).astype(jnp.bfloat16)


def _spmm_relu_linear_kernel(a_ref, xw_ref, b_ref, h1_ref, h2_ref,
                             wl1_ref, wl2_ref, wl3_ref, bl_ref, o_ref, acc_ref, *, tk):
    # Layer 3: same streamed relu(A @ xw3 + b3), with the final Linear over the concat
    # [h1 | h2 | h3] fused into the k==last finalize (no h3 writeback, no extra pass).
    k = pl.program_id(1)

    @pl.when(k == 0)
    def _():
        acc_ref[...] = jnp.zeros_like(acc_ref)

    off = pl.multiple_of(k * tk, tk)
    acc_ref[...] += jnp.dot(a_ref[...], xw_ref[pl.ds(off, tk), :],
                            preferred_element_type=jnp.float32)

    @pl.when(k == pl.num_programs(1) - 1)
    def _():
        h3 = jnp.maximum(acc_ref[...] + b_ref[...], 0.0)
        o_ref[...] = (jnp.dot(h3, wl3_ref[...], preferred_element_type=jnp.float32)
                      + jnp.dot(h1_ref[...], wl1_ref[...], preferred_element_type=jnp.float32)
                      + jnp.dot(h2_ref[...], wl2_ref[...], preferred_element_type=jnp.float32)
                      + bl_ref[...])


# ----------------------------------------------------------------------------- wrappers


def _xw(x_pad, w, tm):
    n_pad, f_pad = x_pad.shape
    return pl.pallas_call(
        _xw_kernel,
        out_shape=jax.ShapeDtypeStruct((n_pad, H_PAD), jnp.bfloat16),
        grid=(n_pad // tm,),
        in_specs=[pl.BlockSpec((tm, f_pad), lambda i: (i, 0)),
                  pl.BlockSpec((f_pad, H_PAD), lambda i: (0, 0))],
        out_specs=pl.BlockSpec((tm, H_PAD), lambda i: (i, 0)),
        compiler_params=pltpu.CompilerParams(dimension_semantics=("parallel",)),
    )(x_pad, w)


def _spmm_relu_stats(n_real, a_bf16, xw_bf16, bias, tm, tk):
    # HBM-bandwidth-dominant pass: streams A in (tm, tk) bf16 tiles, keeps xw fully
    # VMEM-resident (constant block index => fetched once), accumulates in f32.
    n_pad = a_bf16.shape[0]
    nt = n_pad // tm
    return pl.pallas_call(
        functools.partial(_spmm_relu_stats_kernel, tm=tm, tk=tk),
        out_shape=(jax.ShapeDtypeStruct((n_pad, H_PAD), jnp.float32),
                   jax.ShapeDtypeStruct((nt, 1, H_PAD), jnp.float32),
                   jax.ShapeDtypeStruct((nt, 1, H_PAD), jnp.float32)),
        grid_spec=pltpu.PrefetchScalarGridSpec(
            num_scalar_prefetch=1,
            grid=(nt, n_pad // tk),
            in_specs=[pl.BlockSpec((tm, tk), lambda i, k, n: (i, k)),
                      pl.BlockSpec((n_pad, H_PAD), lambda i, k, n: (0, 0)),
                      pl.BlockSpec((1, H_PAD), lambda i, k, n: (0, 0))],
            out_specs=(pl.BlockSpec((tm, H_PAD), lambda i, k, n: (i, 0)),
                       pl.BlockSpec((1, 1, H_PAD), lambda i, k, n: (i, 0, 0)),
                       pl.BlockSpec((1, 1, H_PAD), lambda i, k, n: (i, 0, 0))),
            scratch_shapes=[pltpu.VMEM((tm, H_PAD), jnp.float32)]),
        compiler_params=pltpu.CompilerParams(
            dimension_semantics=("parallel", "arbitrary"),
            vmem_limit_bytes=VMEM_LIMIT),
    )(n_real, a_bf16, xw_bf16, bias)


def _bn_xw(n_real, h, hsum, hssq, gamma, beta, w_next, tm):
    # Row-tiled, pipelined BN + next-layer xw (replaces the old un-tiled whole-graph
    # kernel that would overflow v7x's 64 MiB VMEM for large graphs).
    n_pad = h.shape[0]
    nt = hsum.shape[0]
    return pl.pallas_call(
        _bn_xw_kernel,
        out_shape=(jax.ShapeDtypeStruct((n_pad, H_PAD), jnp.float32),
                   jax.ShapeDtypeStruct((n_pad, H_PAD), jnp.bfloat16)),
        grid_spec=pltpu.PrefetchScalarGridSpec(
            num_scalar_prefetch=1,
            grid=(n_pad // tm,),
            in_specs=[pl.BlockSpec((tm, H_PAD), lambda i, n: (i, 0)),
                      pl.BlockSpec((nt, 1, H_PAD), lambda i, n: (0, 0, 0)),
                      pl.BlockSpec((nt, 1, H_PAD), lambda i, n: (0, 0, 0)),
                      pl.BlockSpec((1, H_PAD), lambda i, n: (0, 0)),
                      pl.BlockSpec((1, H_PAD), lambda i, n: (0, 0)),
                      pl.BlockSpec((H_PAD, H_PAD), lambda i, n: (0, 0))],
            out_specs=(pl.BlockSpec((tm, H_PAD), lambda i, n: (i, 0)),
                       pl.BlockSpec((tm, H_PAD), lambda i, n: (i, 0)))),
        compiler_params=pltpu.CompilerParams(dimension_semantics=("parallel",)),
    )(n_real, h, hsum, hssq, gamma, beta, w_next)


def _spmm_relu_linear(a_bf16, xw_bf16, bias, h1, h2, wl1, wl2, wl3, bl, tm, tk):
    # Layer-3 streamed pass with the final Linear fused into the finalize step.
    # h1/h2 blocks depend only on the row tile i => fetched once per row tile.
    n_pad = a_bf16.shape[0]
    c_pad = bl.shape[1]
    return pl.pallas_call(
        functools.partial(_spmm_relu_linear_kernel, tk=tk),
        out_shape=jax.ShapeDtypeStruct((n_pad, c_pad), jnp.float32),
        grid_spec=pltpu.PrefetchScalarGridSpec(
            num_scalar_prefetch=0,
            grid=(n_pad // tm, n_pad // tk),
            in_specs=[pl.BlockSpec((tm, tk), lambda i, k: (i, k)),
                      pl.BlockSpec((n_pad, H_PAD), lambda i, k: (0, 0)),
                      pl.BlockSpec((1, H_PAD), lambda i, k: (0, 0)),
                      pl.BlockSpec((tm, H_PAD), lambda i, k: (i, 0)),
                      pl.BlockSpec((tm, H_PAD), lambda i, k: (i, 0)),
                      pl.BlockSpec((H_PAD, c_pad), lambda i, k: (0, 0)),
                      pl.BlockSpec((H_PAD, c_pad), lambda i, k: (0, 0)),
                      pl.BlockSpec((H_PAD, c_pad), lambda i, k: (0, 0)),
                      pl.BlockSpec((1, c_pad), lambda i, k: (0, 0))],
            out_specs=pl.BlockSpec((tm, c_pad), lambda i, k: (i, 0)),
            scratch_shapes=[pltpu.VMEM((tm, H_PAD), jnp.float32)]),
        compiler_params=pltpu.CompilerParams(
            dimension_semantics=("parallel", "arbitrary"),
            vmem_limit_bytes=VMEM_LIMIT),
    )(a_bf16, xw_bf16, bias, h1, h2, wl1, wl2, wl3, bl)


def pad_adjacency(a_hat, n_pad):
    """Lane-padded bf16 A_hat. Build once and reuse across forward calls (no f32
    N_pad^2 intermediate, no per-call re-pad/cast)."""
    n = a_hat.shape[0]
    return jnp.zeros((n_pad, n_pad), jnp.bfloat16).at[:n, :n].set(
        a_hat.astype(jnp.bfloat16))


def gcn_forward(a_pad, x, params, num_classes):
    n, f = x.shape
    n_pad = a_pad.shape[0]
    f_pad = params["w1"].shape[0]
    tm, tk = _tiles(n_pad)
    n_real = jnp.array([n], jnp.int32)   # SMEM scalar: no recompile per graph size n

    x_pad = jnp.zeros((n_pad, f_pad), jnp.float32).at[:n, :f].set(x)

    # layer 1: relu(A @ (x @ W1) + b1) + masked BN partial stats
    xw1 = _xw(x_pad, params["w1"], tm)
    h1r, s1, q1 = _spmm_relu_stats(n_real, a_pad, xw1, params["b1"], tm, tk)
    h1, xw2 = _bn_xw(n_real, h1r, s1, q1, params["g1"], params["be1"], params["w2"], tm)

    # layer 2
    h2r, s2, q2 = _spmm_relu_stats(n_real, a_pad, xw2, params["b2"], tm, tk)
    h2, xw3 = _bn_xw(n_real, h2r, s2, q2, params["g2"], params["be2"], params["w3"], tm)

    # layer 3 (no BatchNorm after conv3) + final Linear over concat([h1, h2, h3]) fused
    out_pad = _spmm_relu_linear(a_pad, xw3, params["b3"], h1, h2,
                                params["wl1"], params["wl2"], params["wl3"],
                                params["bl"], tm, tk)
    return out_pad[:n, :num_classes]


# ----------------------------------------------------------------------------- glue


def build_normalized_adjacency(edge_index, num_nodes, edge_weights=None):
    """Dense D^-1/2 (A + I) D^-1/2, matching PyG GCNConv (add_self_loops=True)."""
    # TODO(synk): true sparse scatter-based message passing has no clean Pallas
    # equivalent here; the GCNConv propagate is realized as this dense normalized
    # adjacency matmul (O(N^2) memory — the real scalability limit for huge graphs).
    src = edge_index[0]
    dst = edge_index[1]
    e = src.shape[0]
    w = jnp.ones((e,), jnp.float32) if edge_weights is None else edge_weights.astype(jnp.float32)
    loop = jnp.arange(num_nodes, dtype=src.dtype)
    src = jnp.concatenate([src, loop])
    dst = jnp.concatenate([dst, loop])
    w = jnp.concatenate([w, jnp.ones((num_nodes,), jnp.float32)])
    deg = jnp.zeros((num_nodes,), jnp.float32).at[dst].add(w)
    dinv = jnp.where(deg > 0, jax.lax.rsqrt(deg), 0.0)
    norm = dinv[src] * dinv[dst] * w
    return jnp.zeros((num_nodes, num_nodes), jnp.float32).at[dst, src].add(norm)


def init_params(key, num_features, num_classes):
    f_pad = _round_up(num_features, 128)
    c_pad = _round_up(num_classes, 128)
    ks = jax.random.split(key, 8)

    def glorot(k, fan_in, fan_out, rows, cols):
        lim = (6.0 / (fan_in + fan_out)) ** 0.5
        w = jax.random.uniform(k, (fan_in, fan_out), jnp.float32, -lim, lim)
        return jnp.zeros((rows, cols), jnp.float32).at[:fan_in, :fan_out].set(w)

    def bn_gamma():
        return jnp.zeros((1, H_PAD), jnp.float32).at[:, :HIDDEN].set(1.0)

    return {
        "w1": glorot(ks[0], num_features, HIDDEN, f_pad, H_PAD),
        "b1": jnp.zeros((1, H_PAD), jnp.float32),
        "g1": bn_gamma(),
        "be1": jnp.zeros((1, H_PAD), jnp.float32),
        "w2": glorot(ks[1], HIDDEN, HIDDEN, H_PAD, H_PAD),
        "b2": jnp.zeros((1, H_PAD), jnp.float32),
        "g2": bn_gamma(),
        "be2": jnp.zeros((1, H_PAD), jnp.float32),
        "w3": glorot(ks[2], HIDDEN, HIDDEN, H_PAD, H_PAD),
        "b3": jnp.zeros((1, H_PAD), jnp.float32),
        "wl1": glorot(ks[3], HIDDEN, num_classes, H_PAD, c_pad),
        "wl2": glorot(ks[4], HIDDEN, num_classes, H_PAD, c_pad),
        "wl3": glorot(ks[5], HIDDEN, num_classes, H_PAD, c_pad),
        "bl": jnp.zeros((1, c_pad), jnp.float32),
    }


def gcn_reference(a_hat, x, params, num_features, num_classes):
    # Pure-JAX f32 reference on the un-padded parameter blocks.
    w1 = params["w1"][:num_features, :HIDDEN]
    w2 = params["w2"][:HIDDEN, :HIDDEN]
    w3 = params["w3"][:HIDDEN, :HIDDEN]
    b1 = params["b1"][:, :HIDDEN]
    b2 = params["b2"][:, :HIDDEN]
    b3 = params["b3"][:, :HIDDEN]
    g1, be1 = params["g1"][:, :HIDDEN], params["be1"][:, :HIDDEN]
    g2, be2 = params["g2"][:, :HIDDEN], params["be2"][:, :HIDDEN]
    wl = jnp.concatenate([params["wl1"][:HIDDEN, :num_classes],
                          params["wl2"][:HIDDEN, :num_classes],
                          params["wl3"][:HIDDEN, :num_classes]], axis=0)
    bl = params["bl"][:, :num_classes]

    def conv(h, w, b):
        return a_hat @ (h @ w) + b

    def bn(h, g, be):
        mu = jnp.mean(h, axis=0, keepdims=True)
        var = jnp.mean((h - mu) ** 2, axis=0, keepdims=True)
        return (h - mu) * jax.lax.rsqrt(var + BN_EPS) * g + be

    h1 = bn(jnp.maximum(conv(x, w1, b1), 0.0), g1, be1)
    h2 = bn(jnp.maximum(conv(h1, w2, b2), 0.0), g2, be2)
    h3 = jnp.maximum(conv(h2, w3, b3), 0.0)
    return jnp.concatenate([h1, h2, h3], axis=1) @ wl + bl


if __name__ == "__main__":
    num_nodes = 16
    num_features = 8
    num_classes = 4
    num_edges = 32

    key = jax.random.PRNGKey(0)
    k_x, k_e, k_p = jax.random.split(key, 3)

    x = jax.random.normal(k_x, (num_nodes, num_features), jnp.float32)
    edge_index = jax.random.randint(k_e, (2, num_edges), 0, num_nodes, jnp.int32)

    a_hat = build_normalized_adjacency(edge_index, num_nodes)
    params = init_params(k_p, num_features, num_classes)

    # Padded bf16 adjacency is built once and can be cached across forward calls.
    n_pad = _round_up(num_nodes, 128)
    a_pad = pad_adjacency(a_hat, n_pad)

    out = gcn_forward(a_pad, x, params, num_classes)
    jax.block_until_ready(out)
    assert out.shape == (num_nodes, num_classes)

    ref = gcn_reference(a_hat, x, params, num_features, num_classes)
    err = float(jnp.max(jnp.abs(out - ref)))
    assert err < 1e-1, f"max abs error vs f32 reference too large: {err}"

    print("KERNEL_OK")
</pallas_src>

<mosaic_0001>
module attributes {stable_mosaic.version = 11 : i64} {
  func.func @_xw_kernel(%arg0: i32, %arg1: memref<128x128xf32, #tpu.memory_space<vmem>>, %arg2: memref<128x128xf32, #tpu.memory_space<vmem>>, %arg3: memref<128x128xbf16, #tpu.memory_space<vmem>>) attributes {dimension_semantics = [#tpu.dimension_semantics<parallel>], iteration_bounds = array<i64: 1>, scalar_prefetch = 0 : i64, scratch_operands = 0 : i64, tpu.core_type = #tpu.core_type<tc>, window_params = [{transform_indices = @transform_0, window_bounds = array<i64: 128, 128>}, {pipeline_mode = #tpu.pipeline_mode<synchronous>, transform_indices = @transform_1, window_bounds = array<i64: 128, 128>}, {transform_indices = @transform_2, window_bounds = array<i64: 128, 128>}]} {
    %c0 = arith.constant 0 : index
    %c0_0 = arith.constant 0 : index
    %0 = vector.load %arg1[%c0, %c0_0] : memref<128x128xf32, #tpu.memory_space<vmem>>, vector<128x128xf32>
    %c0_1 = arith.constant 0 : index
    %c0_2 = arith.constant 0 : index
    %1 = vector.load %arg2[%c0_1, %c0_2] : memref<128x128xf32, #tpu.memory_space<vmem>>, vector<128x128xf32>
    %cst = arith.constant dense<0.000000e+00> : vector<128x128xf32>
    %2 = tpu.matmul %0, %1, %cst {dimension_numbers = #tpu.dot_dimension_numbers<[1], [0], [0], [1], [0, 0, 1, 1], [], []>} : vector<128x128xf32>, vector<128x128xf32>, vector<128x128xf32> -> vector<128x128xf32>
    %3 = arith.truncf %2 : vector<128x128xf32> to vector<128x128xbf16>
    %c0_3 = arith.constant 0 : index
    %c0_4 = arith.constant 0 : index
    %4 = vector.load %arg3[%c0_3, %c0_4] : memref<128x128xbf16, #tpu.memory_space<vmem>>, vector<128x128xbf16>
    tpu.vector_store %arg3[%c0_3, %c0_4], %3 {strides = array<i32>} : memref<128x128xbf16, #tpu.memory_space<vmem>>, vector<128x128xbf16>,
    return
  }
  func.func @transform_0(%arg0: i32) -> (i32, i32) {
    %c0_i32 = arith.constant 0 : i32
    %c0_i32_0 = arith.constant 0 : i32
    return %arg0, %c0_i32 : i32, i32
  }
  func.func @transform_1(%arg0: i32) -> (i32, i32) {
    %c0_i32 = arith.constant 0 : i32
    %c0_i32_0 = arith.constant 0 : i32
    %c0_i32_1 = arith.constant 0 : i32
    return %c0_i32, %c0_i32_0 : i32, i32
  }
  func.func @transform_2(%arg0: i32) -> (i32, i32) {
    %c0_i32 = arith.constant 0 : i32
    %c0_i32_0 = arith.constant 0 : i32
    return %arg0, %c0_i32 : i32, i32
  }
}

</mosaic_0001>

<llo_original>
// kernel: tpu_custom_call.1
$region0: #{tpu_custom_call.1}
  #allocation0 [shape = 'u32[]', space=smem, size = 0x4, offset = 0x4, fixed_abs, tag = 'smem constant byte address 0x4 - core index']
  #allocation1 [shape = 'u32[144,128]{1,0:T(1,128)}', space=vmem, size = 0x12000, scoped, tag = 'internal scratch']
  %s0 = inlined_call_operand.hbm [shape: f32[128,128], index: 0, kind: input, shape index: {}]
  %s1 = inlined_call_operand.hbm [shape: f32[128,128], index: 1, kind: input, shape index: {}]
  %s2 = inlined_call_operand.hbm [shape: bf16[128,128], index: 2, kind: output, shape index: {}]
  %s3 = sld [smem:[#allocation0]]
  $region26: #{tpu_custom_call.1} parent=0
    _
  %s5 = ssub.s32 1, %s3
  %s6 = scalar_select 0, %s5, %s3
  $region1: #{tpu_custom_call.1} parent=0
    #allocation2 [shape = 'u8[65536]{0}', space=vmem, size = 0x10000, scoped, tag = 'input window, operand 0, single buffered']
    #allocation3 [shape = 's32[1]{0}', space=sflag, size = 0x4, scoped, tag = 'scoped memory for tpu_custom_call.1']
    #allocation4 [shape = 's32[1]{0}', space=sflag, size = 0x4, scoped, tag = 'scoped memory for tpu_custom_call.1']
    #allocation5 [shape = 'u8[65536]{0}', space=vmem, size = 0x10000, scoped, tag = 'input window, operand 1, single buffered']
    #allocation6 [shape = 's32[1]{0}', space=sflag, size = 0x4, scoped, tag = 'scoped memory for tpu_custom_call.1']
    #allocation7 [shape = 'u8[32768]{0}', space=vmem, size = 0x8000, scoped, tag = 'output window, operand 0, single buffered']
    %7 = vsyncpa [#allocation3], 0
    %8 = vsyncpa [#allocation6], 0
    %9 = vsyncpa [#allocation4], 0
    // Predicated region
    $region2: #{tpu_custom_call.1} parent=1 // pred_check
      _
    $region3: #{tpu_custom_call.1} parent=1 // pred_check_branch
      %11 = sbr.rel (0) target = $region5
    $region4: #{tpu_custom_call.1} parent=1 // pred_region
      %s13 = ssub.s32 2048, 2048
      %14 = vsyncadd [#allocation3], %s13
      %s15 = sshll.u32 [#allocation2], 4
      %s16 = int_to_ptr.vmem [resolvable:$true] %s15
      %21 = dma.hbm_to_vmem [thread:$0]  %s0, 2048, %s16, [#allocation3], 128, 128, 8
    $region5: #{tpu_custom_call.1} parent=1 // pred_fallthru
      _
    // Predicated region
    $region6: #{tpu_custom_call.1} parent=1 // pred_check
      _
    $region7: #{tpu_custom_call.1} parent=1 // pred_check_branch
      %23 = sbr.rel (0) target = $region9
    $region8: #{tpu_custom_call.1} parent=1 // pred_region
      %s25 = ssub.s32 2048, 2048
      %26 = vsyncadd [#allocation6], %s25
      %s27 = sshll.u32 [#allocation5], 4
      %s28 = int_to_ptr.vmem [resolvable:$true] %s27
      %33 = dma.hbm_to_vmem [thread:$0]  %s1, 2048, %s28, [#allocation6], 128, 128, 8
    $region9: #{tpu_custom_call.1} parent=1 // pred_fallthru
      _
    // Predicated region
    $region10: #{tpu_custom_call.1} parent=1 // pred_check
      _
    $region11: #{tpu_custom_call.1} parent=1 // pred_check_branch
      %35 = sbr.rel (0) target = $region13
    $region12: #{tpu_custom_call.1} parent=1 // pred_region
      %36 = dma.done [#allocation3], 2048
    $region13: #{tpu_custom_call.1} parent=1 // pred_fallthru
      _
    // Predicated region
    $region14: #{tpu_custom_call.1} parent=1 // pred_check
      _
    $region15: #{tpu_custom_call.1} parent=1 // pred_check_branch
      %38 = sbr.rel (0) target = $region17
    $region16: #{tpu_custom_call.1} parent=1 // pred_region
      %39 = dma.done [#allocation6], 2048
    $region17: #{tpu_custom_call.1} parent=1 // pred_fallthru
      _
    %v40 = vld [vmem:[#allocation2] sm:$0xff]
    %v41 = vld [vmem:[#allocation2 + $0x8] sm:$0xff]
    %v42 = vld [vmem:[#allocation2 + $0x10] sm:$0xff]
    %v43 = vld [vmem:[#allocation2 + $0x18] sm:$0xff]
    %v44 = vld [vmem:[#allocation2 + $0x20] sm:$0xff]
    %v45 = vld [vmem:[#allocation2 + $0x28] sm:$0xff]
    %v46 = vld [vmem:[#allocation2 + $0x30] sm:$0xff]
    %v47 = vld [vmem:[#allocation2 + $0x38] sm:$0xff]
    %v48 = vld [vmem:[#allocation2 + $0x40] sm:$0xff]
    %v49 = vld [vmem:[#allocation2 + $0x48] sm:$0xff]
    %v50 = vld [vmem:[#allocation2 + $0x50] sm:$0xff]
    %v51 = vld [vmem:[#allocation2 + $0x58] sm:$0xff]
    %v52 = vld [vmem:[#allocation2 + $0x60] sm:$0xff]
    %v53 = vld [vmem:[#allocation2 + $0x68] sm:$0xff]
    %v54 = vld [vmem:[#allocation2 + $0x70] sm:$0xff]
    %v55 = vld [vmem:[#allocation2 + $0x78] sm:$0xff]
    %v56 = vld [vmem:[#allocation5] sm:$0xff]
    %v57 = vld [vmem:[#allocation5 + $0x8] sm:$0xff]
    %v58 = vld [vmem:[#allocation5 + $0x10] sm:$0xff]
    %v59 = vld [vmem:[#allocation5 + $0x18] sm:$0xff]
    %v60 = vld [vmem:[#allocation5 + $0x20] sm:$0xff]
    %v61 = vld [vmem:[#allocation5 + $0x28] sm:$0xff]
    %v62 = vld [vmem:[#allocation5 + $0x30] sm:$0xff]
    %v63 = vld [vmem:[#allocation5 + $0x38] sm:$0xff]
    %v64 = vld [vmem:[#allocation5 + $0x40] sm:$0xff]
    %v65 = vld [vmem:[#allocation5 + $0x48] sm:$0xff]
    %v66 = vld [vmem:[#allocation5 + $0x50] sm:$0xff]
    %v67 = vld [vmem:[#allocation5 + $0x58] sm:$0xff]
    %v68 = vld [vmem:[#allocation5 + $0x60] sm:$0xff]
    %v69 = vld [vmem:[#allocation5 + $0x68] sm:$0xff]
    %v70 = vld [vmem:[#allocation5 + $0x70] sm:$0xff]
    %v71 = vld [vmem:[#allocation5 + $0x78] sm:$0xff]
    %72 = vmatprep.subr.mxu0 0.0
    %73 = vmatpush1.msra.mxu0 %v56
    %74 = vmatprep.subr.mxu0 0.0
    %75 = vmatpush1.msra.mxu0 %v57
    %76 = vmatprep.subr.mxu0 0.0
    %77 = vmatpush1.msra.mxu0 %v58
    %78 = vmatprep.subr.mxu0 0.0
    %79 = vmatpush1.msra.mxu0 %v59
    %80 = vmatprep.subr.mxu0 0.0
    %81 = vmatpush1.msra.mxu0 %v60
    %82 = vmatprep.subr.mxu0 0.0
    %83 = vmatpush1.msra.mxu0 %v61
    %84 = vmatprep.subr.mxu0 0.0
    %85 = vmatpush1.msra.mxu0 %v62
    %86 = vmatprep.subr.mxu0 0.0
    %87 = vmatpush1.msra.mxu0 %v63
    %88 = vmatprep.subr.mxu0 0.0
    %89 = vmatpush1.msra.mxu0 %v64
    %90 = vmatprep.subr.mxu0 0.0
    %91 = vmatpush1.msra.mxu0 %v65
    %92 = vmatprep.subr.mxu0 0.0
    %93 = vmatpush1.msra.mxu0 %v66
    %94 = vmatprep.subr.mxu0 0.0
    %95 = vmatpush1.msra.mxu0 %v67
    %96 = vmatprep.subr.mxu0 0.0
    %97 = vmatpush1.msra.mxu0 %v68
    %98 = vmatprep.subr.mxu0 0.0
    %99 = vmatpush1.msra.mxu0 %v69
    %100 = vmatprep.subr.mxu0 0.0
    %101 = vmatpush1.msra.mxu0 %v70
    %102 = vmatprep.subr.mxu0 0.0
    %103 = vmatpush1.msra.mxu0 %v71
    %104 = vmatprep.subr.mxu0 0.0
    %105 = vmatpush1.msra.mxu0 0.0
    %106 = vmatprep.subr.mxu0 0.0
    %107 = vmatpush1.msra.mxu0 0.0
    %108 = vmatprep.subr.mxu0 0.0
    %109 = vmatpush1.msra.mxu0 0.0
    %110 = vmatprep.subr.mxu0 0.0
    %111 = vmatpush1.msra.mxu0 0.0
    %112 = vmatprep.subr.mxu0 0.0
    %113 = vmatpush1.msra.mxu0 0.0
    %114 = vmatprep.subr.mxu0 0.0
    %115 = vmatpush1.msra.mxu0 0.0
    %116 = vmatprep.subr.mxu0 0.0
    %117 = vmatpush1.msra.mxu0 0.0
    %118 = vmatprep.subr.mxu0 0.0
    %119 = vmatpush1.msra.mxu0 0.0
    %120 = vmatprep.subr.mxu0 0.0
    %121 = vmatpush1.msra.mxu0 0.0
    %122 = vmatprep.subr.mxu0 0.0
    %123 = vmatpush1.msra.mxu0 0.0
    %124 = vmatprep.subr.mxu0 0.0
    %125 = vmatpush1.msra.mxu0 0.0
    %126 = vmatprep.subr.mxu0 0.0
    %127 = vmatpush1.msra.mxu0 0.0
    %128 = vmatprep.subr.mxu0 0.0
    %129 = vmatpush1.msra.mxu0 0.0
    %130 = vmatprep.subr.mxu0 0.0
    %131 = vmatpush1.msra.mxu0 0.0
    %132 = vmatprep.subr.mxu0 0.0
    %133 = vmatpush1.msra.mxu0 0.0
    %134 = vmatprep.subr.mxu0 0.0
    %135 = vmatpush1.msra.mxu0 0.0
    %136 = vmatprep.mubr.f32.mxu0 0.0
    %137 = vmatmul.mubr.f32.gmra.mrb[0].mxu0 %v40
    %v138 = vpop.f32.mrb[0].mxu0
    %v139 = vadd.f32 0.0, %v138
    %v140 = vpop.f32.mrb[0].mxu0
    %141 = vmatprep.mubr.f32.mxu0 0.0
    %142 = vmatmul.mubr.f32.gmra.mrb[0].mxu0 %v41
    %v143 = vpop.f32.mrb[0].mxu0
    %v144 = vadd.f32 0.0, %v143
    %v145 = vpop.f32.mrb[0].mxu0
    %146 = vmatprep.mubr.f32.mxu0 0.0
    %147 = vmatmul.mubr.f32.gmra.mrb[0].mxu0 %v42
    %v148 = vpop.f32.mrb[0].mxu0
    %v149 = vadd.f32 0.0, %v148
    %v150 = vpop.f32.mrb[0].mxu0
    %151 = vmatprep.mubr.f32.mxu0 0.0
    %152 = vmatmul.mubr.f32.gmra.mrb[0].mxu0 %v43
    %v153 = vpop.f32.mrb[0].mxu0
    %v154 = vadd.f32 0.0, %v153
    %v155 = vpop.f32.mrb[0].mxu0
    %156 = vmatprep.mubr.f32.mxu0 0.0
    %157 = vmatmul.mubr.f32.gmra.mrb[0].mxu0 %v44
    %v158 = vpop.f32.mrb[0].mxu0
    %v159 = vadd.f32 0.0, %v158
    %v160 = vpop.f32.mrb[0].mxu0
    %161 = vmatprep.mubr.f32.mxu0 0.0
    %162 = vmatmul.mubr.f32.gmra.mrb[0].mxu0 %v45
    %v163 = vpop.f32.mrb[0].mxu0
    %v164 = vadd.f32 0.0, %v163
    %v165 = vpop.f32.mrb[0].mxu0
    %166 = vmatprep.mubr.f32.mxu0 0.0
    %167 = vmatmul.mubr.f32.gmra.mrb[0].mxu0 %v46
    %v168 = vpop.f32.mrb[0].mxu0
    %v169 = vadd.f32 0.0, %v168
    %v170 = vpop.f32.mrb[0].mxu0
    %171 = vmatprep.mubr.f32.mxu0 0.0
    %172 = vmatmul.mubr.f32.gmra.mrb[0].mxu0 %v47
    %v173 = vpop.f32.mrb[0].mxu0
    %v174 = vadd.f32 0.0, %v173
    %v175 = vpop.f32.mrb[0].mxu0
    %176 = vmatprep.mubr.f32.mxu0 0.0
    %177 = vmatmul.mubr.f32.gmra.mrb[0].mxu0 %v48
    %v178 = vpop.f32.mrb[0].mxu0
    %v179 = vadd.f32 0.0, %v178
    %v180 = vpop.f32.mrb[0].mxu0
    %181 = vmatprep.mubr.f32.mxu0 0.0
    %182 = vmatmul.mubr.f32.gmra.mrb[0].mxu0 %v49
    %v183 = vpop.f32.mrb[0].mxu0
    %v184 = vadd.f32 0.0, %v183
    %v185 = vpop.f32.mrb[0].mxu0
    %186 = vmatprep.mubr.f32.mxu0 0.0
    %187 = vmatmul.mubr.f32.gmra.mrb[0].mxu0 %v50
    %v188 = vpop.f32.mrb[0].mxu0
    %v189 = vadd.f32 0.0, %v188
    %v190 = vpop.f32.mrb[0].mxu0
    %191 = vmatprep.mubr.f32.mxu0 0.0
    %192 = vmatmul.mubr.f32.gmra.mrb[0].mxu0 %v51
    %v193 = vpop.f32.mrb[0].mxu0
    %v194 = vadd.f32 0.0, %v193
    %v195 = vpop.f32.mrb[0].mxu0
    %196 = vmatprep.mubr.f32.mxu0 0.0
    %197 = vmatmul.mubr.f32.gmra.mrb[0].mxu0 %v52
    %v198 = vpop.f32.mrb[0].mxu0
    %v199 = vadd.f32 0.0, %v198
    %v200 = vpop.f32.mrb[0].mxu0
    %201 = vmatprep.mubr.f32.mxu0 0.0
    %202 = vmatmul.mubr.f32.gmra.mrb[0].mxu0 %v53
    %v203 = vpop.f32.mrb[0].mxu0
    %v204 = vadd.f32 0.0, %v203
    %v205 = vpop.f32.mrb[0].mxu0
    %206 = vmatprep.mubr.f32.mxu0 0.0
    %207 = vmatmul.mubr.f32.gmra.mrb[0].mxu0 %v54
    %v208 = vpop.f32.mrb[0].mxu0
    %v209 = vadd.f32 0.0, %v208
    %v210 = vpop.f32.mrb[0].mxu0
    %211 = vmatprep.mubr.f32.mxu0 0.0
    %212 = vmatmul.mubr.f32.gmra.mrb[0].mxu0 %v55
    %v213 = vpop.f32.mrb[0].mxu0
    %v214 = vadd.f32 0.0, %v213
    %v215 = vpop.f32.mrb[0].mxu0
    %216 = vdwg.mxu0
    %v217 = vpack.c.bf16 %v144, %v139
    %v218 = vpack.c.bf16 %v154, %v149
    %v219 = vpack.c.bf16 %v164, %v159
    %v220 = vpack.c.bf16 %v174, %v169
    %v221 = vpack.c.bf16 %v184, %v179
    %v222 = vpack.c.bf16 %v194, %v189
    %v223 = vpack.c.bf16 %v204, %v199
    %v224 = vpack.c.bf16 %v214, %v209
    %v233 = vunpack.c.l.b16 %v217
    %v234 = vunpack.c.h.b16 %v217
    %v235 = vunpack.c.l.b16 %v218
    %v236 = vunpack.c.h.b16 %v218
    %v237 = vunpack.c.l.b16 %v219
    %v238 = vunpack.c.h.b16 %v219
    %v239 = vunpack.c.l.b16 %v220
    %v240 = vunpack.c.h.b16 %v220
    %v241 = vunpack.c.l.b16 %v221
    %v242 = vunpack.c.h.b16 %v221
    %v243 = vunpack.c.l.b16 %v222
    %v244 = vunpack.c.h.b16 %v222
    %v245 = vunpack.c.l.b16 %v223
    %v246 = vunpack.c.h.b16 %v223
    %v247 = vunpack.c.l.b16 %v224
    %v248 = vunpack.c.h.b16 %v224
    %v249 = vpack.c.b16 %v233, %v233
    %v250 = vpack.c.b16 %v234, %v234
    %v251 = vpack.c.b16 %v235, %v235
    %v252 = vpack.c.b16 %v236, %v236
    %v253 = vpack.c.b16 %v237, %v237
    %v254 = vpack.c.b16 %v238, %v238
    %v255 = vpack.c.b16 %v239, %v239
    %v256 = vpack.c.b16 %v240, %v240
    %v257 = vpack.c.b16 %v241, %v241
    %v258 = vpack.c.b16 %v242, %v242
    %v259 = vpack.c.b16 %v243, %v243
    %v260 = vpack.c.b16 %v244, %v244
    %v261 = vpack.c.b16 %v245, %v245
    %v262 = vpack.c.b16 %v246, %v246
    %v263 = vpack.c.b16 %v247, %v247
    %v264 = vpack.c.b16 %v248, %v248
    %281 = vst [vmem:[#allocation7] sm:$0xf] %v249
    %282 = vst [vmem:[#allocation7 + $0x4] sm:$0xf] %v250
    %283 = vst [vmem:[#allocation7 + $0x8] sm:$0xf] %v251
    %284 = vst [vmem:[#allocation7 + $0xc] sm:$0xf] %v252
    %285 = vst [vmem:[#allocation7 + $0x10] sm:$0xf] %v253
    %286 = vst [vmem:[#allocation7 + $0x14] sm:$0xf] %v254
    %287 = vst [vmem:[#allocation7 + $0x18] sm:$0xf] %v255
    %288 = vst [vmem:[#allocation7 + $0x1c] sm:$0xf] %v256
    %289 = vst [vmem:[#allocation7 + $0x20] sm:$0xf] %v257
    %290 = vst [vmem:[#allocation7 + $0x24] sm:$0xf] %v258
    %291 = vst [vmem:[#allocation7 + $0x28] sm:$0xf] %v259
    %292 = vst [vmem:[#allocation7 + $0x2c] sm:$0xf] %v260
    %293 = vst [vmem:[#allocation7 + $0x30] sm:$0xf] %v261
    %294 = vst [vmem:[#allocation7 + $0x34] sm:$0xf] %v262
    %295 = vst [vmem:[#allocation7 + $0x38] sm:$0xf] %v263
    %296 = vst [vmem:[#allocation7 + $0x3c] sm:$0xf] %v264
    // Predicated region
    $region18: #{tpu_custom_call.1} parent=1 // pred_check
      _
    $region19: #{tpu_custom_call.1} parent=1 // pred_check_branch
      %298 = sbr.rel (0) target = $region21
    $region20: #{tpu_custom_call.1} parent=1 // pred_region
      %s300 = ssub.s32 1024, 1024
      %301 = vsyncadd [#allocation4], %s300
      %s302 = sshll.u32 [#allocation7], 4
      %s303 = int_to_ptr.vmem [resolvable:$true] %s302
      %308 = dma.vmem_to_hbm [thread:$0]  %s303, 1024, %s2, [#allocation4], 64, 64, 4
    $region21: #{tpu_custom_call.1} parent=1 // pred_fallthru
      _
    // Predicated region
    $region22: #{tpu_custom_call.1} parent=1 // pred_check
      _
    $region23: #{tpu_custom_call.1} parent=1 // pred_check_branch
      %310 = sbr.rel (0) target = $region25
    $region24: #{tpu_custom_call.1} parent=1 // pred_region
      %311 = dma.done [#allocation4], 1024
    $region25: #{tpu_custom_call.1} parent=1 // pred_fallthru
      _
    %312 = vsyncpa [#allocation3], 1
    %313 = vsyncpa [#allocation6], 1
    %314 = vsyncpa [#allocation4], 1

</llo_original>
